<compile_context>
chip_gen: v7x
topology: tpu7x:2x2x1
jax: 0.10.0
libtpu: 0.0.40
codegen_flags: <defaults>
</compile_context>

<pallas_src>
import functools

import jax
import jax.numpy as jnp
from jax.experimental import pallas as pl
from jax.experimental.pallas import tpu as pltpu

_LANE = 128
# Soft budget for all double-buffered block buffers of one pallas_call
# (safe on v5e/v6e 128 MiB and v7x 64 MiB physical VMEM).
_VMEM_BLOCK_BUDGET_BYTES = 16 * 1024 * 1024
_TARGET_BLOCK_BYTES = 2 * 1024 * 1024       # ~2 MiB per stream per buffer
_VMEM_LIMIT_BYTES = 32 * 1024 * 1024


# ----------------------------------------------------------------------------
# Kernels (tanh -> EUP slot, blend -> VPU; both hide under the HBM stream).
# ----------------------------------------------------------------------------
def _blend_kernel(pre_ref, prev_ref, out_ref, *, leaky_rate):
    nxt = jnp.tanh(pre_ref[...].astype(jnp.float32))
    prv = prev_ref[...].astype(jnp.float32)
    out_ref[...] = (prv + leaky_rate * (nxt - prv)).astype(out_ref.dtype)


def _tanh_kernel(pre_ref, out_ref):
    # leaky_rate == 1.0 (module default): prev_state contributes nothing.
    out_ref[...] = jnp.tanh(pre_ref[...].astype(jnp.float32)).astype(out_ref.dtype)


def _scaled_tanh_kernel(pre_ref, out_ref, *, leaky_rate):
    # Fresh reservoir state (prev_state=None): (1-a)*0 + a*tanh(pre).
    out_ref[...] = (leaky_rate
                    * jnp.tanh(pre_ref[...].astype(jnp.float32))).astype(out_ref.dtype)


# ----------------------------------------------------------------------------
# Layout helpers
# ----------------------------------------------------------------------------
def _sublane_rows(dtype):
    """Packed sublane tile height for a dtype (8 f32, 16 bf16, 32 int8/fp8)."""
    itemsize = jnp.dtype(dtype).itemsize
    return {4: 8, 2: 16, 1: 32}.get(itemsize, 8)


def _choose_layout(n):
    """Flatten n elements into a lane-dense (rows, cols) slab.

    Returns (cols, rows, padded_n).  Prefers a multiple-of-128 divisor of n
    (no padding); otherwise pads up to a multiple of 1024 so stores stay
    unmasked and the block is always (8,128)-tileable.
    """
    for c in (4096, 2048, 1024, 512, 256, 128):
        if n % c == 0:
            return c, n // c, n
    padded = ((n + 1023) // 1024) * 1024
    return 1024, padded // 1024, padded


def _pick_block_rows(rows, cols, itemsize, sublane, n_streams):
    """Block-row count: ~2 MiB/stream, sublane-aligned, >= 2 grid steps if possible."""
    per_buf = max(1, _VMEM_BLOCK_BUDGET_BYTES // (n_streams * 2))  # double-buffered
    target = min(_TARGET_BLOCK_BYTES, per_buf)
    br = (target // (cols * itemsize)) // sublane * sublane
    br = max(br, sublane)
    if rows < 2 * sublane:
        # Single full-extent block (block dim == array dim is always legal);
        # bounded to < ~0.5 MiB since cols <= 4096.
        return rows
    # Prefer >= 2 grid steps so v7x's two TensorCores both get row work.
    two_step = -(-(-(-rows // 2)) // sublane) * sublane  # ceil(ceil(rows/2)/sublane)*sublane
    return min(br, two_step)


# ----------------------------------------------------------------------------
# Public wrapper
# ----------------------------------------------------------------------------
def activation_leaky(pre_activation, prev_state=None, leaky_rate=1.0,
                     donate_prev_state=False):
    """tanh activation + leaky integration via a Pallas TPU kernel.

    pre_activation: any shape (flattened internally to a lane-dense 2-D slab).
    prev_state:     same shape, or None (fresh reservoir state).
    donate_prev_state: alias the output onto prev_state's buffer (classic
                       in-place ESN state update); only used on the blend path.
    """
    leaky_rate = float(leaky_rate)
    dtype = pre_activation.dtype
    orig_shape = pre_activation.shape
    n = int(pre_activation.size)

    if leaky_rate == 0.0:
        # (1 - 0) * prev + 0 * tanh(pre)  ==  prev  (zeros for a fresh state).
        if prev_state is None:
            return jnp.zeros(orig_shape, dtype)
        return prev_state.astype(dtype).reshape(orig_shape)

    use_prev = (prev_state is not None) and (leaky_rate != 1.0)

    cols, rows, padded_n = _choose_layout(n)

    def to_slab(x):
        flat = x.reshape(-1)
        if padded_n != n:
            flat = jnp.pad(flat, (0, padded_n - n))
        return flat.reshape(rows, cols)

    operands = [to_slab(pre_activation)]
    sublane = _sublane_rows(dtype)
    itemsize = jnp.dtype(dtype).itemsize
    if use_prev:
        operands.append(to_slab(prev_state))
        sublane = max(sublane, _sublane_rows(prev_state.dtype))
        itemsize = max(itemsize, jnp.dtype(prev_state.dtype).itemsize)
        kernel = functools.partial(_blend_kernel, leaky_rate=leaky_rate)
    elif leaky_rate == 1.0:
        kernel = _tanh_kernel
    else:
        kernel = functools.partial(_scaled_tanh_kernel, leaky_rate=leaky_rate)

    n_streams = len(operands) + 1
    block_rows = _pick_block_rows(rows, cols, itemsize, sublane, n_streams)
    grid = (pl.cdiv(rows, block_rows),)
    spec = pl.BlockSpec((block_rows, cols), lambda i: (i, 0))

    aliases = {}
    if (use_prev and donate_prev_state
            and jnp.dtype(prev_state.dtype) == jnp.dtype(dtype)):
        aliases = {1: 0}

    out2d = pl.pallas_call(
        kernel,
        out_shape=jax.ShapeDtypeStruct((rows, cols), dtype),
        grid=grid,
        in_specs=[spec] * len(operands),
        out_specs=spec,
        input_output_aliases=aliases,
        compiler_params=pltpu.CompilerParams(
            dimension_semantics=("parallel",),
            vmem_limit_bytes=_VMEM_LIMIT_BYTES),
    )(*operands)

    out_flat = out2d.reshape(-1)
    if padded_n != n:
        out_flat = out_flat[:n]
    return out_flat.reshape(orig_shape)


# ----------------------------------------------------------------------------
# Pure-JAX reference (f32 intermediates, like the PyTorch module in f32)
# ----------------------------------------------------------------------------
def _reference(pre_activation, prev_state, leaky_rate):
    nxt = jnp.tanh(pre_activation.astype(jnp.float32))
    prv = (jnp.zeros_like(nxt) if prev_state is None
           else prev_state.astype(jnp.float32))
    return ((1.0 - leaky_rate) * prv + leaky_rate * nxt).astype(pre_activation.dtype)


if __name__ == "__main__":
    key = jax.random.PRNGKey(0)
    k1, k2, k3, k4, k5 = jax.random.split(key, 5)

    # Small ESN state, matching the module's (batch, hidden) convention.
    pre = jax.random.normal(k1, (2, 256), dtype=jnp.float32)
    prev = jax.random.normal(k2, (2, 256), dtype=jnp.float32)

    # Blend path (leaky_rate != 1.0, prev_state given): 3 HBM streams.
    out = jax.block_until_ready(activation_leaky(pre, prev, 0.7))
    ref = _reference(pre, prev, 0.7)
    assert out.shape == ref.shape and out.dtype == ref.dtype
    assert jnp.allclose(out, ref, atol=1e-5, rtol=1e-5)

    # Module-default leaky_rate=1.0: prev stream dropped, out = tanh(pre).
    out1 = jax.block_until_ready(activation_leaky(pre, prev, 1.0))
    assert jnp.allclose(out1, _reference(pre, prev, 1.0), atol=1e-5, rtol=1e-5)

    # Fresh reservoir state (prev_state=None): single-input scaled-tanh kernel.
    out0 = jax.block_until_ready(activation_leaky(pre, None, 0.7))
    assert jnp.allclose(out0, _reference(pre, None, 0.7), atol=1e-5, rtol=1e-5)

    # leaky_rate == 0.0: pure passthrough of prev_state, no kernel launch.
    outp = jax.block_until_ready(activation_leaky(pre, prev, 0.0))
    assert jnp.allclose(outp, _reference(pre, prev, 0.0), atol=1e-6, rtol=1e-6)

    # bf16 state large enough to exercise multi-step, dtype-aware tiling
    # (rows=32 at cols=4096, sublane=16 -> 2 grid steps).
    pre_b = jax.random.normal(k3, (64, 2048), dtype=jnp.bfloat16)
    prev_b = jax.random.normal(k4, (64, 2048), dtype=jnp.bfloat16)
    out_b = jax.block_until_ready(activation_leaky(pre_b, prev_b, 0.7))
    ref_b = _reference(pre_b, prev_b, 0.7)
    assert out_b.shape == ref_b.shape and out_b.dtype == ref_b.dtype
    assert jnp.allclose(out_b.astype(jnp.float32), ref_b.astype(jnp.float32),
                        atol=2e-2, rtol=2e-2)

    # Odd element count (3*257 = 771): pad-to-1024 lane-dense path.
    pre_o = jax.random.normal(k5, (3, 257), dtype=jnp.float32)
    out_o = jax.block_until_ready(activation_leaky(pre_o, None, 0.5))
    assert jnp.allclose(out_o, _reference(pre_o, None, 0.5), atol=1e-5, rtol=1e-5)

    print("KERNEL_OK")
</pallas_src>

<mosaic_0001>
module attributes {stable_mosaic.version = 11 : i64} {
  func.func @_blend_kernel(%arg0: i32, %arg1: memref<1x512xf32, #tpu.memory_space<vmem>>, %arg2: memref<1x512xf32, #tpu.memory_space<vmem>>, %arg3: memref<1x512xf32, #tpu.memory_space<vmem>>) attributes {dimension_semantics = [#tpu.dimension_semantics<parallel>], iteration_bounds = array<i64: 1>, scalar_prefetch = 0 : i64, scratch_operands = 0 : i64, tpu.core_type = #tpu.core_type<tc>, window_params = [{transform_indices = @transform_0, window_bounds = array<i64: 1, 512>}, {transform_indices = @transform_1, window_bounds = array<i64: 1, 512>}, {transform_indices = @transform_2, window_bounds = array<i64: 1, 512>}]} {
    %c0 = arith.constant 0 : index
    %c0_0 = arith.constant 0 : index
    %0 = vector.load %arg1[%c0, %c0_0] : memref<1x512xf32, #tpu.memory_space<vmem>>, vector<1x512xf32>
    %1 = math.tanh %0 : vector<1x512xf32>
    %c0_1 = arith.constant 0 : index
    %c0_2 = arith.constant 0 : index
    %2 = vector.load %arg2[%c0_1, %c0_2] : memref<1x512xf32, #tpu.memory_space<vmem>>, vector<1x512xf32>
    %3 = arith.subf %1, %2 : vector<1x512xf32>
    %cst = arith.constant 0.699999988 : f32
    %4 = vector.broadcast %cst : f32 to vector<1x512xf32>
    %5 = arith.mulf %4, %3 : vector<1x512xf32>
    %6 = arith.addf %2, %5 : vector<1x512xf32>
    %c0_3 = arith.constant 0 : index
    %c0_4 = arith.constant 0 : index
    %7 = vector.load %arg3[%c0_3, %c0_4] : memref<1x512xf32, #tpu.memory_space<vmem>>, vector<1x512xf32>
    tpu.vector_store %arg3[%c0_3, %c0_4], %6 {strides = array<i32>} : memref<1x512xf32, #tpu.memory_space<vmem>>, vector<1x512xf32>,
    return
  }
  func.func @transform_0(%arg0: i32) -> (i32, i32) {
    %c0_i32 = arith.constant 0 : i32
    %c0_i32_0 = arith.constant 0 : i32
    return %arg0, %c0_i32 : i32, i32
  }
  func.func @transform_1(%arg0: i32) -> (i32, i32) {
    %c0_i32 = arith.constant 0 : i32
    %c0_i32_0 = arith.constant 0 : i32
    return %arg0, %c0_i32 : i32, i32
  }
  func.func @transform_2(%arg0: i32) -> (i32, i32) {
    %c0_i32 = arith.constant 0 : i32
    %c0_i32_0 = arith.constant 0 : i32
    return %arg0, %c0_i32 : i32, i32
  }
}

</mosaic_0001>

<llo_original>
// kernel: tpu_custom_call.1
$region0: #{tpu_custom_call.1}
  #allocation0 [shape = 'u32[]', space=smem, size = 0x4, offset = 0x4, fixed_abs, tag = 'smem constant byte address 0x4 - core index']
  #allocation1 [shape = 'u32[144,128]{1,0:T(1,128)}', space=vmem, size = 0x12000, scoped, tag = 'internal scratch']
  %s0 = inlined_call_operand.hbm [shape: f32[1,512], index: 0, kind: input, shape index: {}]
  %s1 = inlined_call_operand.hbm [shape: f32[1,512], index: 1, kind: input, shape index: {}]
  %s2 = inlined_call_operand.hbm [shape: f32[1,512], index: 2, kind: output, shape index: {}]
  %s3 = sld [smem:[#allocation0]]
  $region26: #{tpu_custom_call.1} parent=0
    _
  %s5 = ssub.s32 1, %s3
  %s6 = scalar_select 0, %s5, %s3
  $region1: #{tpu_custom_call.1} parent=0
    #allocation2 [shape = 'u8[2048]{0}', space=vmem, size = 0x800, scoped, tag = 'input window, operand 0, single buffered']
    #allocation3 [shape = 's32[1]{0}', space=sflag, size = 0x4, scoped, tag = 'scoped memory for tpu_custom_call.1']
    #allocation4 [shape = 's32[1]{0}', space=sflag, size = 0x4, scoped, tag = 'scoped memory for tpu_custom_call.1']
    #allocation5 [shape = 'u8[2048]{0}', space=vmem, size = 0x800, scoped, tag = 'input window, operand 1, single buffered']
    #allocation6 [shape = 's32[1]{0}', space=sflag, size = 0x4, scoped, tag = 'scoped memory for tpu_custom_call.1']
    #allocation7 [shape = 'u8[2048]{0}', space=vmem, size = 0x800, scoped, tag = 'output window, operand 0, single buffered']
    %7 = vsyncpa [#allocation3], 0
    %8 = vsyncpa [#allocation6], 0
    %9 = vsyncpa [#allocation4], 0
    // Predicated region
    $region2: #{tpu_custom_call.1} parent=1 // pred_check
      _
    $region3: #{tpu_custom_call.1} parent=1 // pred_check_branch
      %11 = sbr.rel (0) target = $region5
    $region4: #{tpu_custom_call.1} parent=1 // pred_region
      %s13 = ssub.s32 64, 64
      %14 = vsyncadd [#allocation3], %s13
      %s16 = sshll.u32 [#allocation2], 4
      %s17 = int_to_ptr.vmem [resolvable:$true] %s16
      %19 = dma.hbm_to_vmem [thread:$0]  %s0, 64, %s17, [#allocation3]
    $region5: #{tpu_custom_call.1} parent=1 // pred_fallthru
      _
    // Predicated region
    $region6: #{tpu_custom_call.1} parent=1 // pred_check
      _
    $region7: #{tpu_custom_call.1} parent=1 // pred_check_branch
      %21 = sbr.rel (0) target = $region9
    $region8: #{tpu_custom_call.1} parent=1 // pred_region
      %s23 = ssub.s32 64, 64
      %24 = vsyncadd [#allocation6], %s23
      %s26 = sshll.u32 [#allocation5], 4
      %s27 = int_to_ptr.vmem [resolvable:$true] %s26
      %29 = dma.hbm_to_vmem [thread:$0]  %s1, 64, %s27, [#allocation6]
    $region9: #{tpu_custom_call.1} parent=1 // pred_fallthru
      _
    // Predicated region
    $region10: #{tpu_custom_call.1} parent=1 // pred_check
      _
    $region11: #{tpu_custom_call.1} parent=1 // pred_check_branch
      %31 = sbr.rel (0) target = $region13
    $region12: #{tpu_custom_call.1} parent=1 // pred_region
      %32 = dma.done [#allocation3], 64
    $region13: #{tpu_custom_call.1} parent=1 // pred_fallthru
      _
    // Predicated region
    $region14: #{tpu_custom_call.1} parent=1 // pred_check
      _
    $region15: #{tpu_custom_call.1} parent=1 // pred_check_branch
      %34 = sbr.rel (0) target = $region17
    $region16: #{tpu_custom_call.1} parent=1 // pred_region
      %35 = dma.done [#allocation6], 64
    $region17: #{tpu_custom_call.1} parent=1 // pred_fallthru
      _
    %v36 = vld [vmem:[#allocation2] sm:$0xf]
    %v37 = vtanh.pop %v36
    %v38 = vld [vmem:[#allocation5] sm:$0xf]
    %v39 = vsub.f32 %v37, %v38
    %v40 = vmul.f32 %v39, 0.7
    %v41 = vadd.f32 %v38, %v40
    %v42 = vlaneseq
    %vm43 = vcmp.ge.s32.totalorder %v42, 0
    %vm44 = vcmp.lt.s32.totalorder %v42, 512
    %vm45 = vmand %vm43, %vm44
    %46 = vst.msk [vmem:[#allocation7] sm:$0xf] %vm45, %v41
    // Predicated region
    $region18: #{tpu_custom_call.1} parent=1 // pred_check
      _
    $region19: #{tpu_custom_call.1} parent=1 // pred_check_branch
      %48 = sbr.rel (0) target = $region21
    $region20: #{tpu_custom_call.1} parent=1 // pred_region
      %s50 = ssub.s32 64, 64
      %51 = vsyncadd [#allocation4], %s50
      %s53 = sshll.u32 [#allocation7], 4
      %s54 = int_to_ptr.vmem [resolvable:$true] %s53
      %56 = dma.vmem_to_hbm [thread:$0]  %s54, 64, %s2, [#allocation4]
    $region21: #{tpu_custom_call.1} parent=1 // pred_fallthru
      _
    // Predicated region
    $region22: #{tpu_custom_call.1} parent=1 // pred_check
      _
    $region23: #{tpu_custom_call.1} parent=1 // pred_check_branch
      %58 = sbr.rel (0) target = $region25
    $region24: #{tpu_custom_call.1} parent=1 // pred_region
      %59 = dma.done [#allocation4], 64
    $region25: #{tpu_custom_call.1} parent=1 // pred_fallthru
      _
    %60 = vsyncpa [#allocation3], 1
    %61 = vsyncpa [#allocation6], 1
    %62 = vsyncpa [#allocation4], 1

</llo_original>
